<compile_context>
chip_gen: v5e
topology: v5e:2x2
jax: 0.10.0
libtpu: 0.0.40
codegen_flags: <defaults>
</compile_context>

<pallas_src>
import functools

import numpy as np
import jax
import jax.numpy as jnp
from jax.experimental import pallas as pl
from jax.experimental.pallas import tpu as pltpu

_META_WIDTH = 128  # lane-dense packed per-row metadata width


def _pick_tile(n, candidates):
    for c in candidates:
        if n % c == 0:
            return c
    return n  # fall back to the full extent (always a legal block dim)


def _supcon_kernel(f_row_ref, f_t_ref, rhs_small_ref, row_meta_ref, novel_col_ref,
                   out_ref, exp_nk_acc, *, num_protos, inv_temp):
    j = pl.program_id(1)
    n_col = pl.num_programs(1)

    # 1/T folded into the small LHS tile in-kernel; bf16 operands for the MXU.
    lhs = (f_row_ref[...].astype(jnp.float32) * inv_temp).astype(jnp.bfloat16)  # (TM, K)

    @pl.when(j == 0)
    def _():
        exp_nk_acc[...] = jnp.zeros_like(exp_nk_acc)

    # Column tile of similarities on the MXU: (TM, K) x (K, TN) -> (TM, TN) f32.
    s = jax.lax.dot_general(lhs, f_t_ref[...], (((1,), (0,)), ((), ())),
                            preferred_element_type=jnp.float32)
    # TODO(synk): like the PyTorch module, no per-row max subtraction before exp;
    # relies on L2-normalized features and T=0.2 keeping sim/T small.
    exp_s = jnp.exp(s)                                    # EUP-bound hot spot
    nc = novel_col_ref[...]                               # (1, TN) novel-column mask
    exp_nk_acc[...] += jnp.sum(exp_s * nc, axis=1, keepdims=True)   # (TM, 1)

    @pl.when(j == n_col - 1)
    def _():
        meta = row_meta_ref[...]                          # (TM, 128) packed row metadata
        onehot = meta[:, :num_protos]                     # (TM, B) base-proto one-hot
        novel_row = meta[:, num_protos:num_protos + 1]    # (TM, 1) novel fg flag
        diag_s = meta[:, num_protos + 1:num_protos + 2]   # (TM, 1) ||f_i||^2 / T
        n_novel = meta[:, num_protos + 2:num_protos + 3]  # (TM, 1) #novel (constant col)
        base_row = jnp.sum(onehot, axis=1, keepdims=True)  # (TM, 1) base fg flag

        # One small MXU push: prototype similarities + novel-column matvec.
        # rhs_small = [protos^T | features^T @ novel]   (K, B+1), bf16.
        pg = jax.lax.dot_general(lhs, rhs_small_ref[...], (((1,), (0,)), ((), ())),
                                 preferred_element_type=jnp.float32)  # (TM, B+1)
        p = pg[:, :num_protos]                            # ni_pk / bi_pk  (already / T)
        s_nov_sum = pg[:, num_protos:num_protos + 1]      # sum_{j novel} s_ij

        exp_nk_sum = exp_nk_acc[...]                      # (TM, 1) accumulated over M
        diag_exp = jnp.exp(diag_s)

        # ---------------- novel branch (fused masked-log algebra) ----------------
        exp_sum = exp_nk_sum - novel_row * diag_exp       # drop the j == i term
        pk_sum = jnp.sum(p, axis=1, keepdims=True)        # raw proto-sim sum (as in ref)
        denom_arg = exp_sum + pk_sum
        # NaN guard: non-novel rows are masked out below, but log(<=0)*0 = NaN
        # would still poison the tile sum, so give them a benign argument.
        denom_arg = jnp.where(novel_row > 0.0, denom_arg, 1.0)
        log_denom = jnp.log(denom_arg)
        cnt = n_novel - novel_row                         # (#novel - 1) on novel rows
        numer = (s_nov_sum - novel_row * diag_s) - cnt * log_denom
        row_loss_novel = -(numer / jnp.maximum(cnt, 1.0)) * novel_row

        # ---------------- base branch ----------------
        bi_pi = jnp.sum(p * onehot, axis=1, keepdims=True)        # <f_i, proto[label_i]>/T
        exp_pk_sum = jnp.sum(jnp.exp(p), axis=1, keepdims=True)
        base_log_prob = bi_pi - jnp.log(exp_nk_sum + exp_pk_sum)  # argument > 0 always
        row_loss_base = -base_log_prob * base_row

        novel_part = jnp.sum(row_loss_novel, axis=0, keepdims=True)  # (1, 1)
        base_part = jnp.sum(row_loss_base, axis=0, keepdims=True)    # (1, 1)
        # Single lane-dense (1, 128) output row: lane 0 = novel partial, lane 1 = base.
        lane = jax.lax.broadcasted_iota(jnp.int32, (1, _META_WIDTH), 1)
        out_ref[0] = jnp.where(lane == 0, novel_part,
                               jnp.where(lane == 1, base_part, 0.0))


def supcon_loss_with_prototype(features, labels, protos, proto_labels,
                               temperature=0.2, num_classes=12,
                               tile_m=None, tile_n=None):
    """Masked, static-shape equivalent of SupConLossWithPrototype.forward."""
    M, K = features.shape
    B = protos.shape[0]
    assert B + 3 <= _META_WIDTH

    # Row tile: 256 fills the v6e/v7x 256-row MXU (the demo is a single grid point).
    if tile_m is None:
        tile_m = _pick_tile(M, (256, 128, 64, 32, 16, 8))
    # Column (reduction over M) tile keeps features^T out of resident VMEM at large M.
    if tile_n is None:
        tile_n = _pick_tile(M, (512, 256, 128))
    assert M % tile_m == 0 and M % tile_n == 0
    n_row = M // tile_m
    n_col = M // tile_n

    inv_temp = 1.0 / float(temperature)

    # bf16 MXU operands (f32 accumulation in-kernel): halves DMA traffic and the
    # VMEM footprint of the big K-major RHS.  No K padding needed: full-extent
    # block dims are always legal.
    f_bf = features.astype(jnp.float32).astype(jnp.bfloat16)          # (M, K)
    p_bf = protos.astype(jnp.float32).astype(jnp.bfloat16)            # (B, K)
    f_t = f_bf.T                                                      # (K, M)  K-major RHS
    f_bf32 = f_bf.astype(jnp.float32)

    fg = labels != num_classes
    match = labels[:, None] == proto_labels[None, :]                  # (M, B)
    base = jnp.any(match, axis=1) & fg
    novel = fg & ~base
    novel_f = novel.astype(jnp.float32)
    # TODO(synk): duplicate proto_labels would make this one-hot multi-hot and
    # double-count those rows, diverging from protos[labels[base]] in the reference.
    base_onehot = (match & fg[:, None]).astype(jnp.float32)           # (M, B)

    # g = features^T @ novel: lets the kernel get sum_{j novel} s_ij from one extra
    # MXU column instead of a (TM, M) masked VPU multiply + XLU reduce per tile.
    g = (f_bf32.T @ novel_f).astype(jnp.bfloat16)                     # (K,)
    rhs_small = jnp.concatenate([p_bf.T, g[:, None]], axis=1)         # (K, B+1) bf16

    # Packed per-row side data, lane-padded to 128:
    # [base one-hot | novel flag | ||f_i||^2 / T | #novel].
    diag_s = inv_temp * jnp.sum(f_bf32 * f_bf32, axis=1)              # (M,)
    n_novel_f = jnp.sum(novel_f)
    row_meta = jnp.concatenate(
        [base_onehot, novel_f[:, None], diag_s[:, None],
         jnp.broadcast_to(n_novel_f, (M, 1))], axis=1)                # (M, B+3)
    row_meta = jnp.pad(row_meta, ((0, 0), (0, _META_WIDTH - (B + 3))))
    novel_col = novel_f.reshape(1, M)

    kernel = functools.partial(_supcon_kernel, num_protos=B, inv_temp=inv_temp)

    parts = pl.pallas_call(
        kernel,
        out_shape=jax.ShapeDtypeStruct((n_row, 1, _META_WIDTH), jnp.float32),
        grid_spec=pltpu.PrefetchScalarGridSpec(
            num_scalar_prefetch=0,
            grid=(n_row, n_col),              # row tiles parallel, M-reduction last
            in_specs=[
                pl.BlockSpec((tile_m, K), lambda i, j: (i, 0)),            # feature rows (bf16)
                pl.BlockSpec((K, tile_n), lambda i, j: (0, j)),            # features^T col tile
                pl.BlockSpec((K, B + 1), lambda i, j: (0, 0)),             # [protos^T | g] (bf16)
                pl.BlockSpec((tile_m, _META_WIDTH), lambda i, j: (i, 0)),  # packed row masks
                pl.BlockSpec((1, tile_n), lambda i, j: (0, j)),            # novel column mask
            ],
            out_specs=pl.BlockSpec((1, 1, _META_WIDTH), lambda i, j: (i, 0, 0)),
            scratch_shapes=[pltpu.VMEM((tile_m, 1), jnp.float32)],         # exp-sum accumulator
        ),
        compiler_params=pltpu.CompilerParams(
            dimension_semantics=("parallel", "arbitrary"),
            vmem_limit_bytes=32 * 1024 * 1024),
    )(f_bf, f_t, rhs_small, row_meta, novel_col)

    n_novel_i = jnp.sum(novel.astype(jnp.int32))
    numel = jnp.sum(fg.astype(jnp.float32))
    loss_novel = jnp.where(n_novel_i > 1, jnp.sum(parts[:, 0, 0]), 0.0)
    loss_base = jnp.where(jnp.any(base), jnp.sum(parts[:, 0, 1]), 0.0)
    # TODO(synk): the original runtime `assert loss >= 0 / exit()` is a host-side
    # check; it is performed in __main__ rather than inside the traced kernel.
    return (loss_novel + loss_base) / numel


def reference_loss(features, labels, protos, proto_labels, temperature, num_classes):
    """Pure-numpy faithful transcription of the PyTorch forward (float64)."""
    f = np.asarray(features, dtype=np.float64)
    l = np.asarray(labels)
    p = np.asarray(protos, dtype=np.float64)
    plab = np.asarray(proto_labels)

    fg = l != num_classes
    f = f[fg]
    l = l[fg]
    numel = f.shape[0]
    base = np.equal(l, plab.reshape(-1, 1)).any(axis=0)
    novel = ~base

    if novel.sum() > 1:
        fn = f[novel]
        ni_pk = fn @ p.T / temperature
        ni_nj = fn @ fn.T / temperature
        mask = np.ones_like(ni_nj)
        np.fill_diagonal(mask, 0)
        exp_ni_nj = np.exp(ni_nj) * mask
        ln = l[novel]
        label_mask = np.equal(ln, ln.T)  # 1-D, all True (as in the PyTorch code)
        log_prob = ni_nj - np.log(exp_ni_nj.sum(1, keepdims=True)
                                  + ni_pk.sum(1, keepdims=True))
        loss_novel = -(log_prob * mask * label_mask).sum(1) / (label_mask * mask).sum(1)
        loss_novel = loss_novel.sum()
    else:
        loss_novel = 0.0

    if base.any():
        fb = f[base]
        fn = f[novel]
        bi_pi = np.einsum('nc,nc->n', fb, p[l[base]]) / temperature
        bi_nk = fb @ fn.T / temperature
        bi_pk = fb @ p.T / temperature
        base_log_prob = bi_pi - np.log(np.exp(bi_nk).sum(1) + np.exp(bi_pk).sum(1))
        loss_base = (-base_log_prob).sum()
    else:
        loss_base = 0.0

    return (loss_novel + loss_base) / numel


if __name__ == "__main__":
    key = jax.random.PRNGKey(0)
    M, K, B = 64, 32, 8          # M features of dim K, B base-class prototypes
    NUM_CLASSES = 12             # background label id (labels range over [0, 12])
    TEMPERATURE = 0.2

    kf, kp_, kl = jax.random.split(key, 3)
    # Positive, L2-normalized features/protos (as produced by the contrastive head).
    features = jax.random.uniform(kf, (M, K), jnp.float32, 0.1, 1.0)
    features = features / jnp.linalg.norm(features, axis=1, keepdims=True)
    protos = jax.random.uniform(kp_, (B, K), jnp.float32, 0.1, 1.0)
    protos = protos / jnp.linalg.norm(protos, axis=1, keepdims=True)
    labels = jax.random.randint(kl, (M,), 0, NUM_CLASSES + 1, dtype=jnp.int32)
    proto_labels = jnp.arange(B, dtype=jnp.int32)   # base classes are ids 0..B-1

    loss = supcon_loss_with_prototype(features, labels, protos, proto_labels,
                                      temperature=TEMPERATURE,
                                      num_classes=NUM_CLASSES)
    loss = jax.block_until_ready(loss)

    ref = reference_loss(np.asarray(features), np.asarray(labels),
                         np.asarray(protos), np.asarray(proto_labels),
                         TEMPERATURE, NUM_CLASSES)

    assert float(loss) >= 0.0, ("loss became negative", float(loss))
    # Tolerance loosened vs. the f32 version: matmul operands are bf16 (f32 accum).
    np.testing.assert_allclose(float(loss), float(ref), rtol=1e-2, atol=1e-3)
    print("KERNEL_OK")
</pallas_src>

<mosaic_0001>
module attributes {stable_mosaic.version = 11 : i64} {
  func.func @_supcon_kernel(%arg0: i32, %arg1: i32, %arg2: memref<64x32xbf16, #tpu.memory_space<vmem>>, %arg3: memref<32x64xbf16, #tpu.memory_space<vmem>>, %arg4: memref<32x9xbf16, #tpu.memory_space<vmem>>, %arg5: memref<64x128xf32, #tpu.memory_space<vmem>>, %arg6: memref<1x64xf32, #tpu.memory_space<vmem>>, %arg7: memref<1x1x128xf32, #tpu.memory_space<vmem>>, %arg8: memref<64x1xf32, #tpu.memory_space<vmem>>) attributes {dimension_semantics = [#tpu.dimension_semantics<parallel>, #tpu.dimension_semantics<arbitrary>], iteration_bounds = array<i64: 1, 1>, scalar_prefetch = 0 : i64, scratch_operands = 1 : i64, tpu.core_type = #tpu.core_type<tc>, window_params = [{transform_indices = @transform_0, window_bounds = array<i64: 64, 32>}, {transform_indices = @transform_1, window_bounds = array<i64: 32, 64>}, {pipeline_mode = #tpu.pipeline_mode<synchronous>, transform_indices = @transform_2, window_bounds = array<i64: 32, 9>}, {transform_indices = @transform_3, window_bounds = array<i64: 64, 128>}, {transform_indices = @transform_4, window_bounds = array<i64: 1, 64>}, {transform_indices = @transform_5, window_bounds = array<i64: 1, 1, 128>}]} {
    %c0 = arith.constant 0 : index
    %c0_0 = arith.constant 0 : index
    %0 = vector.load %arg2[%c0, %c0_0] : memref<64x32xbf16, #tpu.memory_space<vmem>>, vector<64x32xbf16>
    %1 = arith.extf %0 : vector<64x32xbf16> to vector<64x32xf32>
    %cst = arith.constant 5.000000e+00 : f32
    %2 = vector.broadcast %cst : f32 to vector<64x32xf32>
    %3 = arith.mulf %1, %2 : vector<64x32xf32>
    %4 = arith.truncf %3 : vector<64x32xf32> to vector<64x32xbf16>
    %c0_i32 = arith.constant 0 : i32
    %5 = arith.cmpi eq, %arg1, %c0_i32 : i32
    %6 = arith.extui %5 : i1 to i32
    %c0_i32_1 = arith.constant 0 : i32
    %7 = arith.cmpi ne, %6, %c0_i32_1 : i32
    scf.if %7 {
      %cst_14 = arith.constant 0.000000e+00 : f32
      %22 = vector.broadcast %cst_14 : f32 to vector<64x1xf32>
      %c0_15 = arith.constant 0 : index
      %c0_16 = arith.constant 0 : index
      %23 = vector.load %arg8[%c0_15, %c0_16] : memref<64x1xf32, #tpu.memory_space<vmem>>, vector<64x1xf32>
      tpu.vector_store %arg8[%c0_15, %c0_16], %22 {strides = array<i32>} : memref<64x1xf32, #tpu.memory_space<vmem>>, vector<64x1xf32>,
    } else {
    }
    %c0_2 = arith.constant 0 : index
    %c0_3 = arith.constant 0 : index
    %8 = vector.load %arg3[%c0_2, %c0_3] : memref<32x64xbf16, #tpu.memory_space<vmem>>, vector<32x64xbf16>
    %cst_4 = arith.constant dense<0.000000e+00> : vector<64x64xf32>
    %9 = tpu.matmul %4, %8, %cst_4 {dimension_numbers = #tpu.dot_dimension_numbers<[1], [0], [0], [1], [0, 0, 1, 1], [], []>} : vector<64x32xbf16>, vector<32x64xbf16>, vector<64x64xf32> -> vector<64x64xf32>
    %10 = math.exp %9 : vector<64x64xf32>
    %c0_5 = arith.constant 0 : index
    %c0_6 = arith.constant 0 : index
    %11 = vector.load %arg6[%c0_5, %c0_6] : memref<1x64xf32, #tpu.memory_space<vmem>>, vector<1x64xf32>
    %c0_7 = arith.constant 0 : index
    %c0_8 = arith.constant 0 : index
    %12 = vector.load %arg8[%c0_7, %c0_8] : memref<64x1xf32, #tpu.memory_space<vmem>>, vector<64x1xf32>
    %13 = vector.broadcast %11 : vector<1x64xf32> to vector<64x64xf32>
    %14 = arith.mulf %10, %13 : vector<64x64xf32>
    %cst_9 = arith.constant dense<0.000000e+00> : vector<64xf32>
    %15 = vector.multi_reduction <add>, %14, %cst_9 [1] : vector<64x64xf32> to vector<64xf32>
    %16 = vector.shape_cast %15 : vector<64xf32> to vector<64x1xf32>
    %17 = arith.addf %12, %16 : vector<64x1xf32>
    %c0_10 = arith.constant 0 : index
    %c0_11 = arith.constant 0 : index
    %18 = vector.load %arg8[%c0_10, %c0_11] : memref<64x1xf32, #tpu.memory_space<vmem>>, vector<64x1xf32>
    tpu.vector_store %arg8[%c0_10, %c0_11], %17 {strides = array<i32>} : memref<64x1xf32, #tpu.memory_space<vmem>>, vector<64x1xf32>,
    %c0_i32_12 = arith.constant 0 : i32
    %19 = arith.cmpi eq, %arg1, %c0_i32_12 : i32
    %20 = arith.extui %19 : i1 to i32
    %c0_i32_13 = arith.constant 0 : i32
    %21 = arith.cmpi ne, %20, %c0_i32_13 : i32
    scf.if %21 {
      %c0_14 = arith.constant 0 : index
      %c0_15 = arith.constant 0 : index
      %22 = vector.load %arg5[%c0_14, %c0_15] : memref<64x128xf32, #tpu.memory_space<vmem>>, vector<64x128xf32>
      %23 = vector.extract_strided_slice %22 {offsets = [0, 0], sizes = [64, 8], strides = [1, 1]} : vector<64x128xf32> to vector<64x8xf32>
      %24 = vector.extract_strided_slice %22 {offsets = [0, 8], sizes = [64, 1], strides = [1, 1]} : vector<64x128xf32> to vector<64x1xf32>
      %25 = vector.extract_strided_slice %22 {offsets = [0, 9], sizes = [64, 1], strides = [1, 1]} : vector<64x128xf32> to vector<64x1xf32>
      %26 = vector.extract_strided_slice %22 {offsets = [0, 10], sizes = [64, 1], strides = [1, 1]} : vector<64x128xf32> to vector<64x1xf32>
      %cst_16 = arith.constant dense<0.000000e+00> : vector<64xf32>
      %27 = vector.multi_reduction <add>, %23, %cst_16 [1] : vector<64x8xf32> to vector<64xf32>
      %28 = vector.shape_cast %27 : vector<64xf32> to vector<64x1xf32>
      %c0_17 = arith.constant 0 : index
      %c0_18 = arith.constant 0 : index
      %29 = vector.load %arg4[%c0_17, %c0_18] : memref<32x9xbf16, #tpu.memory_space<vmem>>, vector<32x9xbf16>
      %cst_19 = arith.constant dense<0.000000e+00> : vector<64x9xf32>
      %30 = tpu.matmul %4, %29, %cst_19 {dimension_numbers = #tpu.dot_dimension_numbers<[1], [0], [0], [1], [0, 0, 1, 1], [], []>} : vector<64x32xbf16>, vector<32x9xbf16>, vector<64x9xf32> -> vector<64x9xf32>
      %31 = vector.extract_strided_slice %30 {offsets = [0, 0], sizes = [64, 8], strides = [1, 1]} : vector<64x9xf32> to vector<64x8xf32>
      %32 = vector.extract_strided_slice %30 {offsets = [0, 8], sizes = [64, 1], strides = [1, 1]} : vector<64x9xf32> to vector<64x1xf32>
      %c0_20 = arith.constant 0 : index
      %c0_21 = arith.constant 0 : index
      %33 = vector.load %arg8[%c0_20, %c0_21] : memref<64x1xf32, #tpu.memory_space<vmem>>, vector<64x1xf32>
      %34 = math.exp %25 : vector<64x1xf32>
      %35 = arith.mulf %24, %34 : vector<64x1xf32>
      %36 = arith.subf %33, %35 : vector<64x1xf32>
      %cst_22 = arith.constant dense<0.000000e+00> : vector<64xf32>
      %37 = vector.multi_reduction <add>, %31, %cst_22 [1] : vector<64x8xf32> to vector<64xf32>
      %38 = vector.shape_cast %37 : vector<64xf32> to vector<64x1xf32>
      %39 = arith.addf %36, %38 : vector<64x1xf32>
      %cst_23 = arith.constant 0.000000e+00 : f32
      %40 = vector.broadcast %cst_23 : f32 to vector<64x1xf32>
      %41 = arith.cmpf ogt, %24, %40 : vector<64x1xf32>
      %cst_24 = arith.constant 1.000000e+00 : f32
      %42 = vector.broadcast %cst_24 : f32 to vector<64x1xf32>
      %43 = arith.select %41, %39, %42 : vector<64x1xi1>, vector<64x1xf32>
      %44 = math.log %43 : vector<64x1xf32>
      %45 = arith.subf %26, %24 : vector<64x1xf32>
      %46 = arith.mulf %24, %25 : vector<64x1xf32>
      %47 = arith.subf %32, %46 : vector<64x1xf32>
      %48 = arith.mulf %45, %44 : vector<64x1xf32>
      %49 = arith.subf %47, %48 : vector<64x1xf32>
      %cst_25 = arith.constant 1.000000e+00 : f32
      %50 = vector.broadcast %cst_25 : f32 to vector<64x1xf32>
      %51 = arith.maximumf %45, %50 : vector<64x1xf32>
      %52 = arith.divf %49, %51 : vector<64x1xf32>
      %cst_26 = arith.constant 0.000000e+00 : f32
      %53 = vector.broadcast %cst_26 : f32 to vector<64x1xf32>
      %54 = arith.subf %53, %52 : vector<64x1xf32>
      %55 = arith.mulf %54, %24 : vector<64x1xf32>
      %56 = arith.mulf %31, %23 : vector<64x8xf32>
      %cst_27 = arith.constant dense<0.000000e+00> : vector<64xf32>
      %57 = vector.multi_reduction <add>, %56, %cst_27 [1] : vector<64x8xf32> to vector<64xf32>
      %58 = vector.shape_cast %57 : vector<64xf32> to vector<64x1xf32>
      %59 = math.exp %31 : vector<64x8xf32>
      %cst_28 = arith.constant dense<0.000000e+00> : vector<64xf32>
      %60 = vector.multi_reduction <add>, %59, %cst_28 [1] : vector<64x8xf32> to vector<64xf32>
      %61 = vector.shape_cast %60 : vector<64xf32> to vector<64x1xf32>
      %62 = arith.addf %33, %61 : vector<64x1xf32>
      %63 = math.log %62 : vector<64x1xf32>
      %64 = arith.subf %58, %63 : vector<64x1xf32>
      %cst_29 = arith.constant 0.000000e+00 : f32
      %65 = vector.broadcast %cst_29 : f32 to vector<64x1xf32>
      %66 = arith.subf %65, %64 : vector<64x1xf32>
      %67 = arith.mulf %66, %28 : vector<64x1xf32>
      %cst_30 = arith.constant dense<0.000000e+00> : vector<1xf32>
      %68 = vector.multi_reduction <add>, %55, %cst_30 [0] : vector<64x1xf32> to vector<1xf32>
      %69 = vector.shape_cast %68 : vector<1xf32> to vector<1x1xf32>
      %cst_31 = arith.constant dense<0.000000e+00> : vector<1xf32>
      %70 = vector.multi_reduction <add>, %67, %cst_31 [0] : vector<64x1xf32> to vector<1xf32>
      %71 = vector.shape_cast %70 : vector<1xf32> to vector<1x1xf32>
      %72 = tpu.iota {dimensions = array<i32: 1>} : vector<1x128xi32>
      %c0_i32_32 = arith.constant 0 : i32
      %73 = vector.broadcast %c0_i32_32 : i32 to vector<1x128xi32>
      %74 = arith.cmpi eq, %72, %73 : vector<1x128xi32>
      %c1_i32 = arith.constant 1 : i32
      %75 = vector.broadcast %c1_i32 : i32 to vector<1x128xi32>
      %76 = arith.cmpi eq, %72, %75 : vector<1x128xi32>
      %cst_33 = arith.constant 0.000000e+00 : f32
      %77 = vector.shape_cast %71 : vector<1x1xf32> to vector<1x1xf32>
      %78 = vector.broadcast %77 : vector<1x1xf32> to vector<1x128xf32>
      %79 = vector.broadcast %cst_33 : f32 to vector<1x128xf32>
      %80 = arith.select %76, %78, %79 : vector<1x128xi1>, vector<1x128xf32>
      %81 = vector.shape_cast %69 : vector<1x1xf32> to vector<1x1xf32>
      %82 = vector.broadcast %81 : vector<1x1xf32> to vector<1x128xf32>
      %83 = arith.select %74, %82, %80 : vector<1x128xi1>, vector<1x128xf32>
      %c0_34 = arith.constant 0 : index
      %c0_35 = arith.constant 0 : index
      %c0_36 = arith.constant 0 : index
      %84 = vector.load %arg7[%c0_34, %c0_35, %c0_36] : memref<1x1x128xf32, #tpu.memory_space<vmem>>, vector<1x1x128xf32>
      %85 = vector.shape_cast %84 : vector<1x1x128xf32> to vector<1x128xf32>
      %86 = vector.shape_cast %83 : vector<1x128xf32> to vector<1x1x128xf32>
      tpu.vector_store %arg7[%c0_34, %c0_35, %c0_36], %86 {strides = array<i32>} : memref<1x1x128xf32, #tpu.memory_space<vmem>>, vector<1x1x128xf32>,
    } else {
    }
    return
  }
  func.func @transform_0(%arg0: i32, %arg1: i32) -> (i32, i32) {
    %c0_i32 = arith.constant 0 : i32
    %c0_i32_0 = arith.constant 0 : i32
    return %arg0, %c0_i32 : i32, i32
  }
  func.func @transform_1(%arg0: i32, %arg1: i32) -> (i32, i32) {
    %c0_i32 = arith.constant 0 : i32
    %c0_i32_0 = arith.constant 0 : i32
    return %c0_i32, %arg1 : i32, i32
  }
  func.func @transform_2(%arg0: i32, %arg1: i32) -> (i32, i32) {
    %c0_i32 = arith.constant 0 : i32
    %c0_i32_0 = arith.constant 0 : i32
    %c0_i32_1 = arith.constant 0 : i32
    return %c0_i32, %c0_i32_0 : i32, i32
  }
  func.func @transform_3(%arg0: i32, %arg1: i32) -> (i32, i32) {
    %c0_i32 = arith.constant 0 : i32
    %c0_i32_0 = arith.constant 0 : i32
    return %arg0, %c0_i32 : i32, i32
  }
  func.func @transform_4(%arg0: i32, %arg1: i32) -> (i32, i32) {
    %c0_i32 = arith.constant 0 : i32
    %c0_i32_0 = arith.constant 0 : i32
    return %c0_i32, %arg1 : i32, i32
  }
  func.func @transform_5(%arg0: i32, %arg1: i32) -> (i32, i32, i32) {
    %c0_i32 = arith.constant 0 : i32
    %c0_i32_0 = arith.constant 0 : i32
    %c0_i32_1 = arith.constant 0 : i32
    return %arg0, %c0_i32, %c0_i32_0 : i32, i32, i32
  }
}

</mosaic_0001>

<llo_original>
// kernel: tpu_custom_call.1
$region0: #{tpu_custom_call.1}
  #allocation0 [shape = 'u32[]', space=smem, size = 0x4, offset = 0x4, fixed_abs, tag = 'smem constant byte address 0x4 - core index']
  #allocation1 [shape = 'u32[72,128]{1,0:T(1,128)}', space=vmem, size = 0x9000, scoped, tag = 'internal scratch']
  #allocation2 [shape = 'f32[64,1]{1,0:T(8,128)}', space=vmem, size = 0x8000, scoped, tag = 'scratch operand']
  %s0 = inlined_call_operand.vmem [shape: bf16[64,32], index: 0, kind: input, shape index: {}]
  %s1 = inlined_call_operand.vmem [shape: bf16[32,64], index: 1, kind: input, shape index: {}]
  %s2 = inlined_call_operand.vmem [shape: bf16[32,9], index: 2, kind: input, shape index: {}]
  %s3 = inlined_call_operand.hbm [shape: f32[64,128], index: 3, kind: input, shape index: {}]
  %s4 = inlined_call_operand.vmem [shape: f32[1,64], index: 4, kind: input, shape index: {}]
  %s5 = inlined_call_operand.hbm [shape: f32[1,1,128], index: 5, kind: output, shape index: {}]
  %s6 = sld [smem:[#allocation0]]
  $region42: #{tpu_custom_call.1} parent=0
    _
  %s8 = ssub.s32 1, %s6
  %s9 = scalar_select 0, %s8, %s6
  $region1: #{tpu_custom_call.1} parent=0
    #allocation3 [shape = 'u8[32768]{0}', space=vmem, size = 0x8000, scoped, tag = 'input window, operand 3, single buffered']
    #allocation4 [shape = 's32[1]{0}', space=sflag, size = 0x4, scoped, tag = 'scoped memory for tpu_custom_call.1']
    #allocation5 [shape = 's32[1]{0}', space=sflag, size = 0x4, scoped, tag = 'scoped memory for tpu_custom_call.1']
    #allocation6 [shape = 'u8[512]{0}', space=vmem, size = 0x400, scoped, tag = 'output window, operand 0, single buffered']
    %10 = vsyncpa [#allocation4], 0
    %11 = vsyncpa [#allocation5], 0
    // Predicated region
    $region2: #{tpu_custom_call.1} parent=1 // pred_check
      _
    $region3: #{tpu_custom_call.1} parent=1 // pred_check_branch
      %13 = sbr.rel (0) target = $region5
    $region4: #{tpu_custom_call.1} parent=1 // pred_region
      _
    $region5: #{tpu_custom_call.1} parent=1 // pred_fallthru
      _
    // Predicated region
    $region6: #{tpu_custom_call.1} parent=1 // pred_check
      _
    $region7: #{tpu_custom_call.1} parent=1 // pred_check_branch
      %15 = sbr.rel (0) target = $region9
    $region8: #{tpu_custom_call.1} parent=1 // pred_region
      _
    $region9: #{tpu_custom_call.1} parent=1 // pred_fallthru
      _
    // Predicated region
    $region10: #{tpu_custom_call.1} parent=1 // pred_check
      _
    $region11: #{tpu_custom_call.1} parent=1 // pred_check_branch
      %17 = sbr.rel (0) target = $region13
    $region12: #{tpu_custom_call.1} parent=1 // pred_region
      _
    $region13: #{tpu_custom_call.1} parent=1 // pred_fallthru
      _
    // Predicated region
    $region14: #{tpu_custom_call.1} parent=1 // pred_check
      _
    $region15: #{tpu_custom_call.1} parent=1 // pred_check_branch
      %19 = sbr.rel (0) target = $region17
    $region16: #{tpu_custom_call.1} parent=1 // pred_region
      %21 = vsyncadd [#allocation4], 0
      %s22 = sshll.u32 %s3, 4
      %s23 = int_to_ptr.hbm [resolvable:$true] %s22
      %s24 = sshll.u32 [#allocation3], 4
      %s25 = int_to_ptr.vmem [resolvable:$true] %s24
      %30 = dma.hbm_to_vmem [thread:$0]  %s23, 1024, %s25, [#allocation4], 128, 128, 8
    $region17: #{tpu_custom_call.1} parent=1 // pred_fallthru
      _
    // Predicated region
    $region18: #{tpu_custom_call.1} parent=1 // pred_check
      _
    $region19: #{tpu_custom_call.1} parent=1 // pred_check_branch
      %32 = sbr.rel (0) target = $region21
    $region20: #{tpu_custom_call.1} parent=1 // pred_region
      _
    $region21: #{tpu_custom_call.1} parent=1 // pred_fallthru
      _
    // Predicated region
    $region22: #{tpu_custom_call.1} parent=1 // pred_check
      _
    $region23: #{tpu_custom_call.1} parent=1 // pred_check_branch
      %34 = sbr.rel (0) target = $region25
    $region24: #{tpu_custom_call.1} parent=1 // pred_region
      %36 = dma.done [#allocation4], 1024
    $region25: #{tpu_custom_call.1} parent=1 // pred_fallthru
      _
    %v38 = vld [vmem:[%s0] sm:$0xf]
    %v39 = vld [vmem:[%s0 + $0x4] sm:$0xf]
    %v40 = vld [vmem:[%s0 + $0x8] sm:$0xf]
    %v41 = vld [vmem:[%s0 + $0xc] sm:$0xf]
    %v42 = vld [vmem:[%s0 + $0x10] sm:$0xf]
    %v43 = vld [vmem:[%s0 + $0x14] sm:$0xf]
    %v44 = vld [vmem:[%s0 + $0x18] sm:$0xf]
    %v45 = vld [vmem:[%s0 + $0x1c] sm:$0xf]
    %v46 = vunpack.c.l.bf16 %v38
    %v47 = vunpack.c.l.bf16 %v39
    %v48 = vunpack.c.l.bf16 %v40
    %v49 = vunpack.c.l.bf16 %v41
    %v50 = vunpack.c.l.bf16 %v42
    %v51 = vunpack.c.l.bf16 %v43
    %v52 = vunpack.c.l.bf16 %v44
    %v53 = vunpack.c.l.bf16 %v45
    %v54 = vmul.f32 %v46, 5.0
    %v55 = vmul.f32 %v47, 5.0
    %v56 = vmul.f32 %v48, 5.0
    %v57 = vmul.f32 %v49, 5.0
    %v58 = vmul.f32 %v50, 5.0
    %v59 = vmul.f32 %v51, 5.0
    %v60 = vmul.f32 %v52, 5.0
    %v61 = vmul.f32 %v53, 5.0
    %v62 = vpack.c.bf16 %v55, %v54
    %v63 = vpack.c.bf16 %v57, %v56
    %v64 = vpack.c.bf16 %v59, %v58
    %v65 = vpack.c.bf16 %v61, %v60
    %p66 = scmp.eq.s32.totalorder 0, 0
    // Predicated region
    $region26: #{tpu_custom_call.1} parent=1 // pred_check
      %p67 = pneg %p66
    $region27: #{tpu_custom_call.1} parent=1 // pred_check_branch
      %69 = sbr.rel (%p67) target = $region29
    $region28: #{tpu_custom_call.1} parent=1 // pred_region
      %vm70 = vcmask 7168
      %71 = vst.msk [vmem:[#allocation2] sm:$0xff] %vm70, 0.0
      %72 = vst.msk [vmem:[#allocation2 + $0x8] sm:$0xff] %vm70, 0.0
      %73 = vst.msk [vmem:[#allocation2 + $0x10] sm:$0xff] %vm70, 0.0
      %74 = vst.msk [vmem:[#allocation2 + $0x18] sm:$0xff] %vm70, 0.0
      %75 = vst.msk [vmem:[#allocation2 + $0x20] sm:$0xff] %vm70, 0.0
      %76 = vst.msk [vmem:[#allocation2 + $0x28] sm:$0xff] %vm70, 0.0
      %77 = vst.msk [vmem:[#allocation2 + $0x30] sm:$0xff] %vm70, 0.0
      %78 = vst.msk [vmem:[#allocation2 + $0x38] sm:$0xff] %vm70, 0.0
    $region29: #{tpu_custom_call.1} parent=1 // pred_fallthru
      _
    %v79 = vld [vmem:[%s1] sm:$0xf]
    %v80 = vld [vmem:[%s1 + $0x4] sm:$0xf]
    %v81 = vld [vmem:[%s1 + $0x8] sm:$0xf]
    %v82 = vld [vmem:[%s1 + $0xc] sm:$0xf]
    %v87 = vunpack.c.l.b16 %v79
    %v88 = vunpack.c.l.b16 %v80
    %v89 = vunpack.c.l.b16 %v81
    %v90 = vunpack.c.l.b16 %v82
    %v91 = vpack.c.b16 %v88, %v87
    %v92 = vpack.c.b16 %v90, %v89
    %vm95 = vcmask 261120
    %v97 = vsel %vm95, %v62, 0
    %v100 = vsel %vm95, %v63, 0
    %v103 = vsel %vm95, %v64, 0
    %v106 = vsel %vm95, %v65, 0
    %108 = vmatpush.bf16.msra.mxu0 0
    %109 = vmatpush.bf16.msra.mxu0 0
    %110 = vmatpush.bf16.msra.mxu0 0
    %111 = vmatpush.bf16.msra.mxu0 0
    %112 = vmatpush.bf16.msra.mxu0 0
    %113 = vmatpush.bf16.msra.mxu0 0
    %114 = vmatpush.bf16.msra.mxu0 %v92
    %115 = vmatpush.bf16.msra.mxu0 %v91
    %116 = vmatmul.bf16.gmra.mxu0 %v97
    %v117 = vpop.f32.mrf.mxu0
    %v118 = vadd.f32 0.0, %v117
    %v119 = vpop.f32.mrf.mxu0
    %v120 = vadd.f32 0.0, %v119
    %121 = vmatmul.bf16.gmra.mxu0 %v100
    %v122 = vpop.f32.mrf.mxu0
    %v123 = vadd.f32 0.0, %v122
    %v124 = vpop.f32.mrf.mxu0
    %v125 = vadd.f32 0.0, %v124
    %126 = vmatmul.bf16.gmra.mxu0 %v103
    %v127 = vpop.f32.mrf.mxu0
    %v128 = vadd.f32 0.0, %v127
    %v129 = vpop.f32.mrf.mxu0
    %v130 = vadd.f32 0.0, %v129
    %131 = vmatmul.bf16.gmra.mxu0 %v106
    %v132 = vpop.f32.mrf.mxu0
    %v133 = vadd.f32 0.0, %v132
    %v134 = vpop.f32.mrf.mxu0
    %v135 = vadd.f32 0.0, %v134
    %136 = vdwg.mxu0
    %v137 = vmul.f32 %v118, 1.442695
    %v138 = vpow.pop %v137
    %v139 = vmul.f32 %v120, 1.442695
    %v140 = vpow.pop %v139
    %v141 = vmul.f32 %v123, 1.442695
    %v142 = vpow.pop %v141
    %v143 = vmul.f32 %v125, 1.442695
    %v144 = vpow.pop %v143
    %v145 = vmul.f32 %v128, 1.442695
    %v146 = vpow.pop %v145
    %v147 = vmul.f32 %v130, 1.442695
    %v148 = vpow.pop %v147
    %v149 = vmul.f32 %v133, 1.442695
    %v150 = vpow.pop %v149
    %v151 = vmul.f32 %v135, 1.442695
    %v152 = vpow.pop %v151
    %v153 = vld [vmem:[%s4] sm:$0x1]
    %v154 = vld [vmem:[#allocation2] sm:$0xff]
    %v155 = vld [vmem:[#allocation2 + $0x8] sm:$0xff]
    %v156 = vld [vmem:[#allocation2 + $0x10] sm:$0xff]
    %v157 = vld [vmem:[#allocation2 + $0x18] sm:$0xff]
    %v158 = vld [vmem:[#allocation2 + $0x20] sm:$0xff]
    %v159 = vld [vmem:[#allocation2 + $0x28] sm:$0xff]
    %v160 = vld [vmem:[#allocation2 + $0x30] sm:$0xff]
    %v161 = vld [vmem:[#allocation2 + $0x38] sm:$0xff]
    %v163 = vperm.slane %v153, 0
    %v165 = vmul.f32 %v138, %v163
    %v166 = vmul.f32 %v140, %v163
    %v167 = vmul.f32 %v142, %v163
    %v168 = vmul.f32 %v144, %v163
    %v169 = vmul.f32 %v146, %v163
    %v170 = vmul.f32 %v148, %v163
    %v171 = vmul.f32 %v150, %v163
    %v172 = vmul.f32 %v152, %v163
    %vm173 = vcmask 523264
    %v174 = vsel %vm173, %v165, 0.0
    %175 = vadd.xlane.f32.xlu0 %v174
    %v176 = vpop.xlane.xlu0 %175
    %v177 = vsel %vm173, %v166, 0.0
    %178 = vadd.xlane.f32.xlu0 %v177
    %v179 = vpop.xlane.xlu0 %178
    %v180 = vsel %vm173, %v167, 0.0
    %181 = vadd.xlane.f32.xlu0 %v180
    %v182 = vpop.xlane.xlu0 %181
    %v183 = vsel %vm173, %v168, 0.0
    %184 = vadd.xlane.f32.xlu0 %v183
    %v185 = vpop.xlane.xlu0 %184
    %v186 = vsel %vm173, %v169, 0.0
    %187 = vadd.xlane.f32.xlu0 %v186
    %v188 = vpop.xlane.xlu0 %187
    %v189 = vsel %vm173, %v170, 0.0
    %190 = vadd.xlane.f32.xlu0 %v189
    %v191 = vpop.xlane.xlu0 %190
    %v192 = vsel %vm173, %v171, 0.0
    %193 = vadd.xlane.f32.xlu0 %v192
    %v194 = vpop.xlane.xlu0 %193
    %v195 = vsel %vm173, %v172, 0.0
    %196 = vadd.xlane.f32.xlu0 %v195
    %v197 = vpop.xlane.xlu0 %196
    %v198 = vadd.f32 %v154, %v176
    %v199 = vadd.f32 %v155, %v179
    %v200 = vadd.f32 %v156, %v182
    %v201 = vadd.f32 %v157, %v185
    %v202 = vadd.f32 %v158, %v188
    %v203 = vadd.f32 %v159, %v191
    %v204 = vadd.f32 %v160, %v194
    %v205 = vadd.f32 %v161, %v197
    %vm206 = vcmask 7168
    %207 = vst.msk [vmem:[#allocation2] sm:$0xff] %vm206, %v198
    %208 = vst.msk [vmem:[#allocation2 + $0x8] sm:$0xff] %vm206, %v199
    %209 = vst.msk [vmem:[#allocation2 + $0x10] sm:$0xff] %vm206, %v200
    %210 = vst.msk [vmem:[#allocation2 + $0x18] sm:$0xff] %vm206, %v201
    %211 = vst.msk [vmem:[#allocation2 + $0x20] sm:$0xff] %vm206, %v202
    %212 = vst.msk [vmem:[#allocation2 + $0x28] sm:$0xff] %vm206, %v203
    %213 = vst.msk [vmem:[#allocation2 + $0x30] sm:$0xff] %vm206, %v204
    %214 = vst.msk [vmem:[#allocation2 + $0x38] sm:$0xff] %vm206, %v205
    // Predicated region
    $region30: #{tpu_custom_call.1} parent=1 // pred_check
      %p215 = pneg %p66
    $region31: #{tpu_custom_call.1} parent=1 // pred_check_branch
      %217 = sbr.rel (%p215) target = $region33
    $region32: #{tpu_custom_call.1} parent=1 // pred_region
      %v218 = vld [vmem:[#allocation3] sm:$0xff]
      %v219 = vld [vmem:[#allocation3 + $0x8] sm:$0xff]
      %v220 = vld [vmem:[#allocation3 + $0x10] sm:$0xff]
      %v221 = vld [vmem:[#allocation3 + $0x18] sm:$0xff]
      %v222 = vld [vmem:[#allocation3 + $0x20] sm:$0xff]
      %v223 = vld [vmem:[#allocation3 + $0x28] sm:$0xff]
      %v224 = vld [vmem:[#allocation3 + $0x30] sm:$0xff]
      %v225 = vld [vmem:[#allocation3 + $0x38] sm:$0xff]
      %vm226 = vcmask 64512
      %v227 = vsel %vm226, %v218, 0.0
      %228 = vadd.xlane.f32.xlu0 %v227
      %v229 = vpop.xlane.xlu0 %228
      %v230 = vsel %vm226, %v219, 0.0
      %231 = vadd.xlane.f32.xlu0 %v230
      %v232 = vpop.xlane.xlu0 %231
      %v233 = vsel %vm226, %v220, 0.0
      %234 = vadd.xlane.f32.xlu0 %v233
      %v235 = vpop.xlane.xlu0 %234
      %v236 = vsel %vm226, %v221, 0.0
      %237 = vadd.xlane.f32.xlu0 %v236
      %v238 = vpop.xlane.xlu0 %237
      %v239 = vsel %vm226, %v222, 0.0
      %240 = vadd.xlane.f32.xlu0 %v239
      %v241 = vpop.xlane.xlu0 %240
      %v242 = vsel %vm226, %v223, 0.0
      %243 = vadd.xlane.f32.xlu0 %v242
      %v244 = vpop.xlane.xlu0 %243
      %v245 = vsel %vm226, %v224, 0.0
      %246 = vadd.xlane.f32.xlu0 %v245
      %v247 = vpop.xlane.xlu0 %246
      %v248 = vsel %vm226, %v225, 0.0
      %249 = vadd.xlane.f32.xlu0 %v248
      %v250 = vpop.xlane.xlu0 %249
      %v251 = vld [vmem:[%s2] sm:$0xf]
      %v252 = vld [vmem:[%s2 + $0x4] sm:$0xf]
      %v253 = vld [vmem:[%s2 + $0x8] sm:$0xf]
      %v254 = vld [vmem:[%s2 + $0xc] sm:$0xf]
      %v259 = vunpack.c.l.b16 %v251
      %v260 = vunpack.c.l.b16 %v252
      %v261 = vunpack.c.l.b16 %v253
      %v262 = vunpack.c.l.b16 %v254
      %v263 = vpack.c.b16 %v260, %v259
      %v264 = vpack.c.b16 %v262, %v261
      %267 = vmatpush.bf16.msra.mxu0 0
      %268 = vmatpush.bf16.msra.mxu0 0
      %269 = vmatpush.bf16.msra.mxu0 0
      %270 = vmatpush.bf16.msra.mxu0 0
      %271 = vmatpush.bf16.msra.mxu0 0
      %272 = vmatpush.bf16.msra.mxu0 0
      %273 = vmatpush.bf16.msra.mxu0 %v264
      %274 = vmatpush.bf16.msra.mxu0 %v263
      %275 = vmatmul.bf16.gmra.mxu0 %v97
      %v276 = vpop.f32.mrf.mxu0
      %v277 = vadd.f32 0.0, %v276
      %v278 = vpop.f32.mrf.mxu0
      %v279 = vadd.f32 0.0, %v278
      %280 = vmatmul.bf16.gmra.mxu0 %v100
      %v281 = vpop.f32.mrf.mxu0
      %v282 = vadd.f32 0.0, %v281
      %v283 = vpop.f32.mrf.mxu0
      %v284 = vadd.f32 0.0, %v283
      %285 = vmatmul.bf16.gmra.mxu0 %v103
      %v286 = vpop.f32.mrf.mxu0
      %v287 = vadd.f32 0.0, %v286
      %v288 = vpop.f32.mrf.mxu0
      %v289 = vadd.f32 0.0, %v288
      %290 = vmatmul.bf16.gmra.mxu0 %v106
      %v291 = vpop.f32.mrf.mxu0
      %v292 = vadd.f32 0.0, %v291
      %v293 = vpop.f32.mrf.mxu0
      %v294 = vadd.f32 0.0, %v293
      %295 = vdwg.mxu0
      %v296 = vld [vmem:[#allocation2] sm:$0xff]
      %v297 = vld [vmem:[#allocation2 + $0x8] sm:$0xff]
      %v298 = vld [vmem:[#allocation2 + $0x10] sm:$0xff]
      %v299 = vld [vmem:[#allocation2 + $0x18] sm:$0xff]
      %v300 = vld [vmem:[#allocation2 + $0x20] sm:$0xff]
      %v301 = vld [vmem:[#allocation2 + $0x28] sm:$0xff]
      %v302 = vld [vmem:[#allocation2 + $0x30] sm:$0xff]
      %v303 = vld [vmem:[#allocation2 + $0x38] sm:$0xff]
      %v304 = vmul.f32 %v218, 1.442695
      %v305 = vpow.pop %v304
      %v306 = vmul.f32 %v219, 1.442695
      %v307 = vpow.pop %v306
      %v308 = vmul.f32 %v220, 1.442695
      %v309 = vpow.pop %v308
      %v310 = vmul.f32 %v221, 1.442695
      %v311 = vpow.pop %v310
      %v312 = vmul.f32 %v222, 1.442695
      %v313 = vpow.pop %v312
      %v314 = vmul.f32 %v223, 1.442695
      %v315 = vpow.pop %v314
      %v316 = vmul.f32 %v224, 1.442695
      %v317 = vpow.pop %v316
      %v318 = vmul.f32 %v225, 1.442695
      %v319 = vpow.pop %v318
      %328 = vrot.lane.b32.xlu0 %v305, 127
      %v329 = vpop.permute.xlu0 %328
      %330 = vrot.lane.b32.xlu0 %v307, 127
      %v331 = vpop.permute.xlu0 %330
      %332 = vrot.lane.b32.xlu0 %v309, 127
      %v333 = vpop.permute.xlu0 %332
      %334 = vrot.lane.b32.xlu0 %v311, 127
      %v335 = vpop.permute.xlu0 %334
      %336 = vrot.lane.b32.xlu0 %v313, 127
      %v337 = vpop.permute.xlu0 %336
      %338 = vrot.lane.b32.xlu0 %v315, 127
      %v339 = vpop.permute.xlu0 %338
      %340 = vrot.lane.b32.xlu0 %v317, 127
      %v341 = vpop.permute.xlu0 %340
      %342 = vrot.lane.b32.xlu0 %v319, 127
      %v343 = vpop.permute.xlu0 %342
      %v352 = vmul.f32 %v218, %v329
      %v353 = vmul.f32 %v219, %v331
      %v354 = vmul.f32 %v220, %v333
      %v355 = vmul.f32 %v221, %v335
      %v356 = vmul.f32 %v222, %v337
      %v357 = vmul.f32 %v223, %v339
      %v358 = vmul.f32 %v224, %v341
      %v359 = vmul.f32 %v225, %v343
      %368 = vrot.lane.b32.xlu0 %v352, 120
      %v369 = vpop.permute.xlu0 %368
      %370 = vrot.lane.b32.xlu0 %v353, 120
      %v371 = vpop.permute.xlu0 %370
      %372 = vrot.lane.b32.xlu0 %v354, 120
      %v373 = vpop.permute.xlu0 %372
      %374 = vrot.lane.b32.xlu0 %v355, 120
      %v375 = vpop.permute.xlu0 %374
      %376 = vrot.lane.b32.xlu0 %v356, 120
      %v377 = vpop.permute.xlu0 %376
      %378 = vrot.lane.b32.xlu0 %v357, 120
      %v379 = vpop.permute.xlu0 %378
      %380 = vrot.lane.b32.xlu0 %v358, 120
      %v381 = vpop.permute.xlu0 %380
      %382 = vrot.lane.b32.xlu0 %v359, 120
      %v383 = vpop.permute.xlu0 %382
      %v392 = vsub.f32 %v296, %v369
      %v393 = vsub.f32 %v297, %v371
      %v394 = vsub.f32 %v298, %v373
      %v395 = vsub.f32 %v299, %v375
      %v396 = vsub.f32 %v300, %v377
      %v397 = vsub.f32 %v301, %v379
      %v398 = vsub.f32 %v302, %v381
      %v399 = vsub.f32 %v303, %v383
      %v400 = vsel %vm226, %v277, 0.0
      %401 = vadd.xlane.f32.xlu0 %v400
      %v402 = vpop.xlane.xlu0 %401
      %v403 = vsel %vm226, %v279, 0.0
      %404 = vadd.xlane.f32.xlu0 %v403
      %v405 = vpop.xlane.xlu0 %404
      %v406 = vsel %vm226, %v282, 0.0
      %407 = vadd.xlane.f32.xlu0 %v406
      %v408 = vpop.xlane.xlu0 %407
      %v409 = vsel %vm226, %v284, 0.0
      %410 = vadd.xlane.f32.xlu0 %v409
      %v411 = vpop.xlane.xlu0 %410
      %v412 = vsel %vm226, %v287, 0.0
      %413 = vadd.xlane.f32.xlu0 %v412
      %v414 = vpop.xlane.xlu0 %413
      %v415 = vsel %vm226, %v289, 0.0
      %416 = vadd.xlane.f32.xlu0 %v415
      %v417 = vpop.xlane.xlu0 %416
      %v418 = vsel %vm226, %v292, 0.0
      %419 = vadd.xlane.f32.xlu0 %v418
      %v420 = vpop.xlane.xlu0 %419
      %v421 = vsel %vm226, %v294, 0.0
      %422 = vadd.xlane.f32.xlu0 %v421
      %v423 = vpop.xlane.xlu0 %422
      %v424 = vadd.f32 %v392, %v402
      %v425 = vadd.f32 %v393, %v405
      %v426 = vadd.f32 %v394, %v408
      %v427 = vadd.f32 %v395, %v411
      %v428 = vadd.f32 %v396, %v414
      %v429 = vadd.f32 %v397, %v417
      %v430 = vadd.f32 %v398, %v420
      %v431 = vadd.f32 %v399, %v423
      %vm432 = vcmp.gt.f32.partialorder %v218, 0.0
      %vm433 = vcmp.gt.f32.partialorder %v219, 0.0
      %vm434 = vcmp.gt.f32.partialorder %v220, 0.0
      %vm435 = vcmp.gt.f32.partialorder %v221, 0.0
      %vm436 = vcmp.gt.f32.partialorder %v222, 0.0
      %vm437 = vcmp.gt.f32.partialorder %v223, 0.0
      %vm438 = vcmp.gt.f32.partialorder %v224, 0.0
      %vm439 = vcmp.gt.f32.partialorder %v225, 0.0
      %448 = vrot.lane.b32.xlu0 %v424, 8
      %v449 = vpop.permute.xlu0 %448
      %450 = vrot.lane.b32.xlu0 %v425, 8
      %v451 = vpop.permute.xlu0 %450
      %452 = vrot.lane.b32.xlu0 %v426, 8
      %v453 = vpop.permute.xlu0 %452
      %454 = vrot.lane.b32.xlu0 %v427, 8
      %v455 = vpop.permute.xlu0 %454
      %456 = vrot.lane.b32.xlu0 %v428, 8
      %v457 = vpop.permute.xlu0 %456
      %458 = vrot.lane.b32.xlu0 %v429, 8
      %v459 = vpop.permute.xlu0 %458
      %460 = vrot.lane.b32.xlu0 %v430, 8
      %v461 = vpop.permute.xlu0 %460
      %462 = vrot.lane.b32.xlu0 %v431, 8
      %v463 = vpop.permute.xlu0 %462
      %v472 = vsel %vm432, %v449, 1.0
      %v473 = vsel %vm433, %v451, 1.0
      %v474 = vsel %vm434, %v453, 1.0
      %v475 = vsel %vm435, %v455, 1.0
      %v476 = vsel %vm436, %v457, 1.0
      %v477 = vsel %vm437, %v459, 1.0
      %v478 = vsel %vm438, %v461, 1.0
      %v479 = vsel %vm439, %v463, 1.0
      %v480 = vlog2.pop %v472
      %v481 = vmul.f32 %v480, 0.6931472
      %v482 = vlog2.pop %v473
      %v483 = vmul.f32 %v482, 0.6931472
      %v484 = vlog2.pop %v474
      %v485 = vmul.f32 %v484, 0.6931472
      %v486 = vlog2.pop %v475
      %v487 = vmul.f32 %v486, 0.6931472
      %v488 = vlog2.pop %v476
      %v489 = vmul.f32 %v488, 0.6931472
      %v490 = vlog2.pop %v477
      %v491 = vmul.f32 %v490, 0.6931472
      %v492 = vlog2.pop %v478
      %v493 = vmul.f32 %v492, 0.6931472
      %v494 = vlog2.pop %v479
      %v495 = vmul.f32 %v494, 0.6931472
      %504 = vrot.lane.b32.xlu0 %v218, 2
      %v505 = vpop.permute.xlu0 %504
      %506 = vrot.lane.b32.xlu0 %v219, 2
      %v507 = vpop.permute.xlu0 %506
      %508 = vrot.lane.b32.xlu0 %v220, 2
      %v509 = vpop.permute.xlu0 %508
      %510 = vrot.lane.b32.xlu0 %v221, 2
      %v511 = vpop.permute.xlu0 %510
      %512 = vrot.lane.b32.xlu0 %v222, 2
      %v513 = vpop.permute.xlu0 %512
      %514 = vrot.lane.b32.xlu0 %v223, 2
      %v515 = vpop.permute.xlu0 %514
      %516 = vrot.lane.b32.xlu0 %v224, 2
      %v517 = vpop.permute.xlu0 %516
      %518 = vrot.lane.b32.xlu0 %v225, 2
      %v519 = vpop.permute.xlu0 %518
      %v528 = vsub.f32 %v218, %v505
      %v529 = vsub.f32 %v219, %v507
      %v530 = vsub.f32 %v220, %v509
      %v531 = vsub.f32 %v221, %v511
      %v532 = vsub.f32 %v222, %v513
      %v533 = vsub.f32 %v223, %v515
      %v534 = vsub.f32 %v224, %v517
      %v535 = vsub.f32 %v225, %v519
      %536 = vrot.lane.b32.xlu0 %v218, 127
      %v537 = vpop.permute.xlu0 %536
      %538 = vrot.lane.b32.xlu0 %v219, 127
      %v539 = vpop.permute.xlu0 %538
      %540 = vrot.lane.b32.xlu0 %v220, 127
      %v541 = vpop.permute.xlu0 %540
      %542 = vrot.lane.b32.xlu0 %v221, 127
      %v543 = vpop.permute.xlu0 %542
      %544 = vrot.lane.b32.xlu0 %v222, 127
      %v545 = vpop.permute.xlu0 %544
      %546 = vrot.lane.b32.xlu0 %v223, 127
      %v547 = vpop.permute.xlu0 %546
      %548 = vrot.lane.b32.xlu0 %v224, 127
      %v549 = vpop.permute.xlu0 %548
      %550 = vrot.lane.b32.xlu0 %v225, 127
      %v551 = vpop.permute.xlu0 %550
      %v560 = vmul.f32 %v218, %v537
      %v561 = vmul.f32 %v219, %v539
      %v562 = vmul.f32 %v220, %v541
      %v563 = vmul.f32 %v221, %v543
      %v564 = vmul.f32 %v222, %v545
      %v565 = vmul.f32 %v223, %v547
      %v566 = vmul.f32 %v224, %v549
      %v567 = vmul.f32 %v225, %v551
      %v568 = vsub.f32 %v277, %v560
      %v569 = vsub.f32 %v279, %v561
      %v570 = vsub.f32 %v282, %v562
      %v571 = vsub.f32 %v284, %v563
      %v572 = vsub.f32 %v287, %v564
      %v573 = vsub.f32 %v289, %v565
      %v574 = vsub.f32 %v292, %v566
      %v575 = vsub.f32 %v294, %v567
      %584 = vrot.lane.b32.xlu0 %v481, 2
      %v585 = vpop.permute.xlu0 %584
      %586 = vrot.lane.b32.xlu0 %v483, 2
      %v587 = vpop.permute.xlu0 %586
      %588 = vrot.lane.b32.xlu0 %v485, 2
      %v589 = vpop.permute.xlu0 %588
      %590 = vrot.lane.b32.xlu0 %v487, 2
      %v591 = vpop.permute.xlu0 %590
      %592 = vrot.lane.b32.xlu0 %v489, 2
      %v593 = vpop.permute.xlu0 %592
      %594 = vrot.lane.b32.xlu0 %v491, 2
      %v595 = vpop.permute.xlu0 %594
      %596 = vrot.lane.b32.xlu0 %v493, 2
      %v597 = vpop.permute.xlu0 %596
      %598 = vrot.lane.b32.xlu0 %v495, 2
      %v599 = vpop.permute.xlu0 %598
      %v608 = vmul.f32 %v528, %v585
      %v609 = vmul.f32 %v529, %v587
      %v610 = vmul.f32 %v530, %v589
      %v611 = vmul.f32 %v531, %v591
      %v612 = vmul.f32 %v532, %v593
      %v613 = vmul.f32 %v533, %v595
      %v614 = vmul.f32 %v534, %v597
      %v615 = vmul.f32 %v535, %v599
      %624 = vrot.lane.b32.xlu0 %v608, 126
      %v625 = vpop.permute.xlu0 %624
      %626 = vrot.lane.b32.xlu0 %v609, 126
      %v627 = vpop.permute.xlu0 %626
      %628 = vrot.lane.b32.xlu0 %v610, 126
      %v629 = vpop.permute.xlu0 %628
      %630 = vrot.lane.b32.xlu0 %v611, 126
      %v631 = vpop.permute.xlu0 %630
      %632 = vrot.lane.b32.xlu0 %v612, 126
      %v633 = vpop.permute.xlu0 %632
      %634 = vrot.lane.b32.xlu0 %v613, 126
      %v635 = vpop.permute.xlu0 %634
      %636 = vrot.lane.b32.xlu0 %v614, 126
      %v637 = vpop.permute.xlu0 %636
      %638 = vrot.lane.b32.xlu0 %v615, 126
      %v639 = vpop.permute.xlu0 %638
      %v648 = vsub.f32 %v568, %v625
      %v649 = vsub.f32 %v569, %v627
      %v650 = vsub.f32 %v570, %v629
      %v651 = vsub.f32 %v571, %v631
      %v652 = vsub.f32 %v572, %v633
      %v653 = vsub.f32 %v573, %v635
      %v654 = vsub.f32 %v574, %v637
      %v655 = vsub.f32 %v575, %v639
      %v656 = vmax.f32 %v528, 1.0
      %v657 = vmax.f32 %v529, 1.0
      %v658 = vmax.f32 %v530, 1.0
      %v659 = vmax.f32 %v531, 1.0
      %v660 = vmax.f32 %v532, 1.0
      %v661 = vmax.f32 %v533, 1.0
      %v662 = vmax.f32 %v534, 1.0
      %v663 = vmax.f32 %v535, 1.0
      %672 = vrot.lane.b32.xlu0 %v656, 126
      %v673 = vpop.permute.xlu0 %672
      %674 = vrot.lane.b32.xlu0 %v657, 126
      %v675 = vpop.permute.xlu0 %674
      %676 = vrot.lane.b32.xlu0 %v658, 126
      %v677 = vpop.permute.xlu0 %676
      %678 = vrot.lane.b32.xlu0 %v659, 126
      %v679 = vpop.permute.xlu0 %678
      %680 = vrot.lane.b32.xlu0 %v660, 126
      %v681 = vpop.permute.xlu0 %680
      %682 = vrot.lane.b32.xlu0 %v661, 126
      %v683 = vpop.permute.xlu0 %682
      %684 = vrot.lane.b32.xlu0 %v662, 126
      %v685 = vpop.permute.xlu0 %684
      %686 = vrot.lane.b32.xlu0 %v663, 126
      %v687 = vpop.permute.xlu0 %686
      %v696 = vrcp.pop %v673
      %v697 = vmul.f32 %v673, %v696
      %v698 = vsub.f32 1.0, %v697
      %v699 = vmul.f32 %v696, %v698
      %v700 = vadd.f32 %v696, %v699
      %vm701 = vweird.f32 %v673
      %vm702 = vweird.f32 %v696
      %vm703 = vmor %vm701, %vm702
      %v704 = vsel %vm703, %v696, %v700
      %v705 = vand.u32 2147483647, %v673
      %vm706 = vcmp.eq.f32.partialorder %v705, 8.507059e+37
      %v707 = vand.u32 %v673, 2147483648
      %v708 = vor.u32 1.1754944e-38, %v707
      %v709 = vsel %vm706, %v708, %v704
      %v710 = vmul.f32 %v648, %v709
      %v711 = vrcp.pop %v675
      %v712 = vmul.f32 %v675, %v711
      %v713 = vsub.f32 1.0, %v712
      %v714 = vmul.f32 %v711, %v713
      %v715 = vadd.f32 %v711, %v714
      %vm716 = vweird.f32 %v675
      %vm717 = vweird.f32 %v711
      %vm718 = vmor %vm716, %vm717
      %v719 = vsel %vm718, %v711, %v715
      %v720 = vand.u32 2147483647, %v675
      %vm721 = vcmp.eq.f32.partialorder %v720, 8.507059e+37
      %v722 = vand.u32 %v675, 2147483648
      %v723 = vor.u32 1.1754944e-38, %v722
      %v724 = vsel %vm721, %v723, %v719
      %v725 = vmul.f32 %v649, %v724
      %v726 = vrcp.pop %v677
      %v727 = vmul.f32 %v677, %v726
      %v728 = vsub.f32 1.0, %v727
      %v729 = vmul.f32 %v726, %v728
      %v730 = vadd.f32 %v726, %v729
      %vm731 = vweird.f32 %v677
      %vm732 = vweird.f32 %v726
      %vm733 = vmor %vm731, %vm732
      %v734 = vsel %vm733, %v726, %v730
      %v735 = vand.u32 2147483647, %v677
      %vm736 = vcmp.eq.f32.partialorder %v735, 8.507059e+37
      %v737 = vand.u32 %v677, 2147483648
      %v738 = vor.u32 1.1754944e-38, %v737
      %v739 = vsel %vm736, %v738, %v734
      %v740 = vmul.f32 %v650, %v739
      %v741 = vrcp.pop %v679
      %v742 = vmul.f32 %v679, %v741
      %v743 = vsub.f32 1.0, %v742
      %v744 = vmul.f32 %v741, %v743
      %v745 = vadd.f32 %v741, %v744
      %vm746 = vweird.f32 %v679
      %vm747 = vweird.f32 %v741
      %vm748 = vmor %vm746, %vm747
      %v749 = vsel %vm748, %v741, %v745
      %v750 = vand.u32 2147483647, %v679
      %vm751 = vcmp.eq.f32.partialorder %v750, 8.507059e+37
      %v752 = vand.u32 %v679, 2147483648
      %v753 = vor.u32 1.1754944e-38, %v752
      %v754 = vsel %vm751, %v753, %v749
      %v755 = vmul.f32 %v651, %v754
      %v756 = vrcp.pop %v681
      %v757 = vmul.f32 %v681, %v756
      %v758 = vsub.f32 1.0, %v757
      %v759 = vmul.f32 %v756, %v758
      %v760 = vadd.f32 %v756, %v759
      %vm761 = vweird.f32 %v681
      %vm762 = vweird.f32 %v756
      %vm763 = vmor %vm761, %vm762
      %v764 = vsel %vm763, %v756, %v760
      %v765 = vand.u32 2147483647, %v681
      %vm766 = vcmp.eq.f32.partialorder %v765, 8.507059e+37
      %v767 = vand.u32 %v681, 2147483648
      %v768 = vor.u32 1.1754944e-38, %v767
      %v769 = vsel %vm766, %v768, %v764
      %v770 = vmul.f32 %v652, %v769
      %v771 = vrcp.pop %v683
      %v772 = vmul.f32 %v683, %v771
      %v773 = vsub.f32 1.0, %v772
      %v774 = vmul.f32 %v771, %v773
      %v775 = vadd.f32 %v771, %v774
      %vm776 = vweird.f32 %v683
      %vm777 = vweird.f32 %v771
      %vm778 = vmor %vm776, %vm777
      %v779 = vsel %vm778, %v771, %v775
      %v780 = vand.u32 2147483647, %v683
      %vm781 = vcmp.eq.f32.partialorder %v780, 8.507059e+37
      %v782 = vand.u32 %v683, 2147483648
      %v783 = vor.u32 1.1754944e-38, %v782
      %v784 = vsel %vm781, %v783, %v779
      %v785 = vmul.f32 %v653, %v784
      %v786 = vrcp.pop %v685
      %v787 = vmul.f32 %v685, %v786
      %v788 = vsub.f32 1.0, %v787
      %v789 = vmul.f32 %v786, %v788
      %v790 = vadd.f32 %v786, %v789
      %vm791 = vweird.f32 %v685
      %vm792 = vweird.f32 %v786
      %vm793 = vmor %vm791, %vm792
      %v794 = vsel %vm793, %v786, %v790
      %v795 = vand.u32 2147483647, %v685
      %vm796 = vcmp.eq.f32.partialorder %v795, 8.507059e+37
      %v797 = vand.u32 %v685, 2147483648
      %v798 = vor.u32 1.1754944e-38, %v797
      %v799 = vsel %vm796, %v798, %v794
      %v800 = vmul.f32 %v654, %v799
      %v801 = vrcp.pop %v687
      %v802 = vmul.f32 %v687, %v801
      %v803 = vsub.f32 1.0, %v802
      %v804 = vmul.f32 %v801, %v803
      %v805 = vadd.f32 %v801, %v804
      %vm806 = vweird.f32 %v687
      %vm807 = vweird.f32 %v801
      %vm808 = vmor %vm806, %vm807
      %v809 = vsel %vm808, %v801, %v805
      %v810 = vand.u32 2147483647, %v687
      %vm811 = vcmp.eq.f32.partialorder %v810, 8.507059e+37
      %v812 = vand.u32 %v687, 2147483648
      %v813 = vor.u32 1.1754944e-38, %v812
      %v814 = vsel %vm811, %v813, %v809
      %v815 = vmul.f32 %v655, %v814
      %v816 = vsub.f32 0.0, %v710
      %v817 = vsub.f32 0.0, %v725
      %v818 = vsub.f32 0.0, %v740
      %v819 = vsub.f32 0.0, %v755
      %v820 = vsub.f32 0.0, %v770
      %v821 = vsub.f32 0.0, %v785
      %v822 = vsub.f32 0.0, %v800
      %v823 = vsub.f32 0.0, %v815
      %v824 = vmul.f32 %v816, %v218
      %v825 = vmul.f32 %v817, %v219
      %v826 = vmul.f32 %v818, %v220
      %v827 = vmul.f32 %v819, %v221
      %v828 = vmul.f32 %v820, %v222
      %v829 = vmul.f32 %v821, %v223
      %v830 = vmul.f32 %v822, %v224
      %v831 = vmul.f32 %v823, %v225
      %v832 = vmul.f32 %v277, %v218
      %v833 = vmul.f32 %v279, %v219
      %v834 = vmul.f32 %v282, %v220
      %v835 = vmul.f32 %v284, %v221
      %v836 = vmul.f32 %v287, %v222
      %v837 = vmul.f32 %v289, %v223
      %v838 = vmul.f32 %v292, %v224
      %v839 = vmul.f32 %v294, %v225
      %v840 = vsel %vm226, %v832, 0.0
      %841 = vadd.xlane.f32.xlu0 %v840
      %v842 = vpop.xlane.xlu0 %841
      %v843 = vsel %vm226, %v833, 0.0
      %844 = vadd.xlane.f32.xlu0 %v843
      %v845 = vpop.xlane.xlu0 %844
      %v846 = vsel %vm226, %v834, 0.0
      %847 = vadd.xlane.f32.xlu0 %v846
      %v848 = vpop.xlane.xlu0 %847
      %v849 = vsel %vm226, %v835, 0.0
      %850 = vadd.xlane.f32.xlu0 %v849
      %v851 = vpop.xlane.xlu0 %850
      %v852 = vsel %vm226, %v836, 0.0
      %853 = vadd.xlane.f32.xlu0 %v852
      %v854 = vpop.xlane.xlu0 %853
      %v855 = vsel %vm226, %v837, 0.0
      %856 = vadd.xlane.f32.xlu0 %v855
      %v857 = vpop.xlane.xlu0 %856
      %v858 = vsel %vm226, %v838, 0.0
      %859 = vadd.xlane.f32.xlu0 %v858
      %v860 = vpop.xlane.xlu0 %859
      %v861 = vsel %vm226, %v839, 0.0
      %862 = vadd.xlane.f32.xlu0 %v861
      %v863 = vpop.xlane.xlu0 %862
      %v864 = vmul.f32 %v277, 1.442695
      %v865 = vpow.pop %v864
      %v866 = vmul.f32 %v279, 1.442695
      %v867 = vpow.pop %v866
      %v868 = vmul.f32 %v282, 1.442695
      %v869 = vpow.pop %v868
      %v870 = vmul.f32 %v284, 1.442695
      %v871 = vpow.pop %v870
      %v872 = vmul.f32 %v287, 1.442695
      %v873 = vpow.pop %v872
      %v874 = vmul.f32 %v289, 1.442695
      %v875 = vpow.pop %v874
      %v876 = vmul.f32 %v292, 1.442695
      %v877 = vpow.pop %v876
      %v878 = vmul.f32 %v294, 1.442695
      %v879 = vpow.pop %v878
      %v880 = vsel %vm226, %v865, 0.0
      %881 = vadd.xlane.f32.xlu0 %v880
      %v882 = vpop.xlane.xlu0 %881
      %v883 = vsel %vm226, %v867, 0.0
      %884 = vadd.xlane.f32.xlu0 %v883
      %v885 = vpop.xlane.xlu0 %884
      %v886 = vsel %vm226, %v869, 0.0
      %887 = vadd.xlane.f32.xlu0 %v886
      %v888 = vpop.xlane.xlu0 %887
      %v889 = vsel %vm226, %v871, 0.0
      %890 = vadd.xlane.f32.xlu0 %v889
      %v891 = vpop.xlane.xlu0 %890
      %v892 = vsel %vm226, %v873, 0.0
      %893 = vadd.xlane.f32.xlu0 %v892
      %v894 = vpop.xlane.xlu0 %893
      %v895 = vsel %vm226, %v875, 0.0
      %896 = vadd.xlane.f32.xlu0 %v895
      %v897 = vpop.xlane.xlu0 %896
      %v898 = vsel %vm226, %v877, 0.0
      %899 = vadd.xlane.f32.xlu0 %v898
      %v900 = vpop.xlane.xlu0 %899
      %v901 = vsel %vm226, %v879, 0.0
      %902 = vadd.xlane.f32.xlu0 %v901
      %v903 = vpop.xlane.xlu0 %902
      %v904 = vadd.f32 %v296, %v882
      %v905 = vadd.f32 %v297, %v885
      %v906 = vadd.f32 %v298, %v888
      %v907 = vadd.f32 %v299, %v891
      %v908 = vadd.f32 %v300, %v894
      %v909 = vadd.f32 %v301, %v897
      %v910 = vadd.f32 %v302, %v900
      %v911 = vadd.f32 %v303, %v903
      %v912 = vlog2.pop %v904
      %v913 = vmul.f32 %v912, 0.6931472
      %v914 = vlog2.pop %v905
      %v915 = vmul.f32 %v914, 0.6931472
      %v916 = vlog2.pop %v906
      %v917 = vmul.f32 %v916, 0.6931472
      %v918 = vlog2.pop %v907
      %v919 = vmul.f32 %v918, 0.6931472
      %v920 = vlog2.pop %v908
      %v921 = vmul.f32 %v920, 0.6931472
      %v922 = vlog2.pop %v909
      %v923 = vmul.f32 %v922, 0.6931472
      %v924 = vlog2.pop %v910
      %v925 = vmul.f32 %v924, 0.6931472
      %v926 = vlog2.pop %v911
      %v927 = vmul.f32 %v926, 0.6931472
      %v928 = vsub.f32 %v842, %v913
      %v929 = vsub.f32 %v845, %v915
      %v930 = vsub.f32 %v848, %v917
      %v931 = vsub.f32 %v851, %v919
      %v932 = vsub.f32 %v854, %v921
      %v933 = vsub.f32 %v857, %v923
      %v934 = vsub.f32 %v860, %v925
      %v935 = vsub.f32 %v863, %v927
      %v936 = vsub.f32 0.0, %v928
      %v937 = vsub.f32 0.0, %v929
      %v938 = vsub.f32 0.0, %v930
      %v939 = vsub.f32 0.0, %v931
      %v940 = vsub.f32 0.0, %v932
      %v941 = vsub.f32 0.0, %v933
      %v942 = vsub.f32 0.0, %v934
      %v943 = vsub.f32 0.0, %v935
      %v944 = vmul.f32 %v936, %v229
      %v945 = vmul.f32 %v937, %v232
      %v946 = vmul.f32 %v938, %v235
      %v947 = vmul.f32 %v939, %v238
      %v948 = vmul.f32 %v940, %v241
      %v949 = vmul.f32 %v941, %v244
      %v950 = vmul.f32 %v942, %v247
      %v951 = vmul.f32 %v943, %v250
      %vm952 = vcmask 72768
      %v953 = vsel %vm952, %v824, 0.0
      %v954 = vsel %vm952, %v825, 0.0
      %v955 = vadd.f32 %v953, %v954
      %v956 = vsel %vm952, %v826, 0.0
      %v957 = vadd.f32 %v955, %v956
      %v958 = vsel %vm952, %v827, 0.0
      %v959 = vadd.f32 %v957, %v958
      %v960 = vsel %vm952, %v828, 0.0
      %v961 = vadd.f32 %v959, %v960
      %v962 = vsel %vm952, %v829, 0.0
      %v963 = vadd.f32 %v961, %v962
      %v964 = vsel %vm952, %v830, 0.0
      %v965 = vadd.f32 %v963, %v964
      %v966 = vsel %vm952, %v831, 0.0
      %v967 = vadd.f32 %v965, %v966
      %v968 = vrot.slane %v967, 4
      %v969 = vadd.f32 %v967, %v968
      %v970 = vrot.slane %v969, 2
      %v971 = vadd.f32 %v969, %v970
      %v972 = vrot.slane %v971, 1
      %v973 = vadd.f32 %v971, %v972
      %v974 = vsel %vm206, %v944, 0.0
      %v975 = vsel %vm206, %v945, 0.0
      %v976 = vadd.f32 %v974, %v975
      %v977 = vsel %vm206, %v946, 0.0
      %v978 = vadd.f32 %v976, %v977
      %v979 = vsel %vm206, %v947, 0.0
      %v980 = vadd.f32 %v978, %v979
      %v981 = vsel %vm206, %v948, 0.0
      %v982 = vadd.f32 %v980, %v981
      %v983 = vsel %vm206, %v949, 0.0
      %v984 = vadd.f32 %v982, %v983
      %v985 = vsel %vm206, %v950, 0.0
      %v986 = vadd.f32 %v984, %v985
      %v987 = vsel %vm206, %v951, 0.0
      %v988 = vadd.f32 %v986, %v987
      %v989 = vrot.slane %v988, 4
      %v990 = vadd.f32 %v988, %v989
      %v991 = vrot.slane %v990, 2
      %v992 = vadd.f32 %v990, %v991
      %v993 = vrot.slane %v992, 1
      %v994 = vadd.f32 %v992, %v993
      %v995 = vlaneseq
      %v996 = vand.u32 %v995, 127
      %vm997 = vcmp.eq.s32.totalorder %v996, 0
      %vm998 = vcmp.eq.s32.totalorder %v996, 1
      %1000 = vset.pattern.permute.xlu0 0
      %1001 = vperm.xlu0 %1000, %v994
      %v1002 = vpop.permute.xlu0 %1001
      %v1004 = vsel %vm998, %v1002, 0.0
      %1006 = vset.pattern.permute.xlu0 8
      %1007 = vperm.xlu0 %1006, %v973
      %v1008 = vpop.permute.xlu0 %1007
      %v1010 = vsel %vm997, %v1008, %v1004
      %1011 = vst [vmem:[#allocation6] sm:$0x1] %v1010
    $region33: #{tpu_custom_call.1} parent=1 // pred_fallthru
      _
    // Predicated region
    $region34: #{tpu_custom_call.1} parent=1 // pred_check
      _
    $region35: #{tpu_custom_call.1} parent=1 // pred_check_branch
      %1013 = sbr.rel (0) target = $region37
    $region36: #{tpu_custom_call.1} parent=1 // pred_region
      %1015 = vsyncadd [#allocation5], 0
      %s1017 = sshll.u32 [#allocation6], 4
      %s1018 = int_to_ptr.vmem [resolvable:$true] %s1017
      %s1019 = sshll.u32 %s5, 4
      %s1020 = int_to_ptr.hbm [resolvable:$true] %s1019
      %1022 = dma.vmem_to_hbm [thread:$0]  %s1018, 16, %s1020, [#allocation5]
    $region37: #{tpu_custom_call.1} parent=1 // pred_fallthru
      _
    // Predicated region
    $region38: #{tpu_custom_call.1} parent=1 // pred_check
      _
    $region39: #{tpu_custom_call.1} parent=1 // pred_check_branch
      %1024 = sbr.rel (0) target = $region41
    $region40: #{tpu_custom_call.1} parent=1 // pred_region
      %1026 = dma.done [#allocation5], 16
    $region41: #{tpu_custom_call.1} parent=1 // pred_fallthru
      _
    %1027 = vsyncpa [#allocation4], 1
    %1028 = vsyncpa [#allocation5], 1

</llo_original>
